<compile_context>
chip_gen: v5e
topology: v5e:2x2
jax: 0.10.0
libtpu: 0.0.40
codegen_flags: <defaults>
</compile_context>

<pallas_src>
import functools
import math

import numpy as np

import jax
import jax.numpy as jnp
from jax.experimental import pallas as pl
from jax.experimental.pallas import tpu as pltpu


# ----------------------------------------------------------------------------
# Host-side (trace-time) interpolation weights, PyTorch align_corners=True.
# Coordinates computed in Python doubles to avoid f32 off-by-one near integers.
# ----------------------------------------------------------------------------
def _axis_taps(out_size: int, in_size: int):
    """Per-output-index (i0, i1, w0, w1) linear-interp taps."""
    scale = 0.0 if out_size == 1 else (in_size - 1) / (out_size - 1)
    taps = []
    for o in range(out_size):
        c = o * scale
        i0 = min(max(int(math.floor(c)), 0), in_size - 1)
        i1 = min(i0 + 1, in_size - 1)
        w1 = float(c - i0)
        w0 = float(1.0 - w1)
        taps.append((i0, i1, w0, w1))
    return taps


def _interp_matrix_np(out_size: int, in_size: int) -> np.ndarray:
    """1-D linear interpolation matrix (out_size, in_size), f32."""
    m = np.zeros((out_size, in_size), np.float64)
    for o, (i0, i1, w0, w1) in enumerate(_axis_taps(out_size, in_size)):
        m[o, i0] += w0
        m[o, i1] += w1
    return m.astype(np.float32)


def _padded_interp_matrix_np(out_padded: int, pad_before: int,
                             out_size: int, in_size: int) -> np.ndarray:
    """Interp matrix embedded into the padded output axis; pad rows are all-zero."""
    m = np.zeros((out_padded, in_size), np.float32)
    m[pad_before:pad_before + out_size, :] = _interp_matrix_np(out_size, in_size)
    return m


def _pick_batch_tile(n: int, per_batch_bytes: int, budget_bytes: int) -> int:
    """Largest divisor of n that fits the VMEM budget, keeping >=2 grid steps if n>=2."""
    best = 1
    for t in range(1, n + 1):
        if n % t != 0:
            continue
        if t * per_batch_bytes > budget_bytes:
            continue
        if n >= 2 and (n // t) < 2:
            continue  # keep >= 2 grid steps so v7x's two TensorCores both get work
        best = max(best, t)
    return best


# ----------------------------------------------------------------------------
# Pallas kernel: fused trilinear-upsample + pad + channel-concat for one batch tile.
# ----------------------------------------------------------------------------
def _up_concat_kernel(wyxT_ref, x1_ref, x2_ref, o_ref, *, c1, z_taps):
    # wyxT_ref: (Hi*Wi, H2*W2) combined, *padded* H/W interpolation operator (f32)
    # x1_ref  : (TB, C1, Di, Hi*Wi)   channels to be upsampled
    # x2_ref  : (TB, C2, D2, H2*W2)   skip connection (already at target size)
    # o_ref   : (TB, C1+C2, D2, H2*W2)
    tb = x1_ref.shape[0]
    hw2 = o_ref.shape[-1]

    # Fused concat: skip channels are a straight, lane-dense (H2*W2-wide) copy.
    o_ref[:, c1:, :, :] = x2_ref[...].astype(o_ref.dtype)

    wyxT = wyxT_ref[...].astype(jnp.float32)            # (HiWi, HW2), tiny
    zero_slab = jnp.zeros((c1, hw2), o_ref.dtype)        # hoisted; only for depth borders

    # TODO(synk): for large output depth (>~32) fold the depth axis into the grid instead
    #             of this static unroll (bounds VMEM per step and avoids a huge unroll).
    for b in range(tb):
        for d, (i0, i1, w0, w1) in enumerate(z_taps):
            if w0 == 0.0 and w1 == 0.0:
                # Depth pad border slice: zero only this slab (no full-block zero fill).
                o_ref[b, 0:c1, d, :] = zero_slab
            else:
                # Depth: 2-tap lerp on the VPU (static taps).
                a = x1_ref[b, :, i0, :].astype(jnp.float32)            # (C1, HiWi)
                if w0 != 1.0:
                    a = a * w0
                if (i1 != i0) and (w1 != 0.0):
                    a = a + x1_ref[b, :, i1, :].astype(jnp.float32) * w1
                # H/W interpolation + spatial padding in one plain 2-D MXU matmul whose
                # result is lane-dense along H2*W2 (zero operator rows produce the pad).
                s = jnp.dot(a, wyxT, preferred_element_type=jnp.float32)  # (C1, HW2)
                o_ref[b, 0:c1, d, :] = s.astype(o_ref.dtype)


# ----------------------------------------------------------------------------
# Wrapper: Up_Concat.forward(x1, x2)
# ----------------------------------------------------------------------------
def up_concat(x1: jnp.ndarray, x2: jnp.ndarray, scale_factor: int = 2) -> jnp.ndarray:
    N, C1, Di, Hi, Wi = x1.shape
    N2, C2, D2, H2, W2 = x2.shape
    assert N == N2, "batch mismatch"

    Do, Ho, Wo = Di * scale_factor, Hi * scale_factor, Wi * scale_factor
    dz, dy, dx = D2 - Do, H2 - Ho, W2 - Wo
    # TODO(synk): negative diffs (crop via F.pad with negative padding) not handled.
    assert dz >= 0 and dy >= 0 and dx >= 0
    dz0, dy0, dx0 = dz // 2, dy // 2, dx // 2

    HWi, HW2 = Hi * Wi, H2 * W2
    C = C1 + C2
    out_dtype = x1.dtype

    # Combined padded H/W operator (the zero rows generate the spatial pad for free).
    # TODO(synk): for large Hi*Wi keep H and W separable (two matmuls) instead of the kron.
    wy_pad = _padded_interp_matrix_np(H2, dy0, Ho, Hi)          # (H2, Hi)
    wx_pad = _padded_interp_matrix_np(W2, dx0, Wo, Wi)          # (W2, Wi)
    wyxT = jnp.asarray(np.kron(wy_pad, wx_pad).T)               # (Hi*Wi, H2*W2)

    # Depth taps (align_corners=True); zero-weight taps mark the depth pad borders.
    z_interior = _axis_taps(Do, Di)
    z_taps = tuple(
        z_interior[d - dz0] if dz0 <= d < dz0 + Do else (0, 0, 0.0, 0.0)
        for d in range(D2))

    # Free HBM reshapes (contiguous NCDHW): lane dim becomes H*W, not W.
    x1r = x1.reshape(N, C1, Di, HWi)
    x2r = x2.reshape(N, C2, D2, HW2)

    # VMEM-budget-driven batch tile; capacity queried per generation (v7x: 64 MiB).
    try:
        vmem_cap = int(pltpu.get_tpu_info().vmem_capacity_bytes)
    except Exception:
        vmem_cap = 64 * 1024 * 1024
    vmem_limit = min(vmem_cap // 2, 96 * 1024 * 1024)
    budget = (3 * vmem_limit) // 4

    el = jnp.dtype(out_dtype).itemsize
    per_batch = 2 * (C1 * Di * HWi * el          # x1 block (double-buffered)
                     + C2 * D2 * HW2 * el        # x2 block
                     + C * D2 * HW2 * el)        # output block
    weights_bytes = HWi * HW2 * 4
    TB = _pick_batch_tile(N, per_batch, max(budget - weights_bytes, per_batch))
    # TODO(synk): if even TB == 1 exceeds the VMEM budget (very large volumes), fold the
    #             output depth axis into the grid as well.

    kernel = functools.partial(_up_concat_kernel, c1=C1, z_taps=z_taps)

    out_flat = pl.pallas_call(
        kernel,
        out_shape=jax.ShapeDtypeStruct((N, C, D2, HW2), out_dtype),
        grid_spec=pltpu.PrefetchScalarGridSpec(
            num_scalar_prefetch=0,
            grid=(N // TB,),
            in_specs=[
                # Few-KB combined operator, constant block (kept as a pallas input rather
                # than a baked-in dense constant for lowering safety).
                pl.BlockSpec((HWi, HW2), lambda i: (0, 0)),
                pl.BlockSpec((TB, C1, Di, HWi), lambda i: (i, 0, 0, 0)),
                pl.BlockSpec((TB, C2, D2, HW2), lambda i: (i, 0, 0, 0)),
            ],
            out_specs=pl.BlockSpec((TB, C, D2, HW2), lambda i: (i, 0, 0, 0)),
        ),
        compiler_params=pltpu.CompilerParams(
            dimension_semantics=("parallel",),     # v7x: batch steps split across 2 TCs
            vmem_limit_bytes=int(vmem_limit),
        ),
    )(wyxT, x1r, x2r)

    return out_flat.reshape(N, C, D2, H2, W2)     # free reshape


up_concat_jit = jax.jit(up_concat, static_argnames=("scale_factor",))


if __name__ == "__main__":
    key = jax.random.PRNGKey(0)
    k1, k2 = jax.random.split(key)

    # Small U-Net-style shapes (5-D NCDHW volumes; x2 is the skip connection).
    x1 = jax.random.normal(k1, (2, 4, 4, 4, 4), dtype=jnp.float32)   # to be upsampled
    x2 = jax.random.normal(k2, (2, 6, 9, 10, 8), dtype=jnp.float32)  # skip connection

    out = up_concat_jit(x1, x2, scale_factor=2)
    out = jax.block_until_ready(out)

    # Upsampled (2,4,8,8,8) -> padded (2,4,9,10,8) -> concat -> (2,10,9,10,8)
    assert out.shape == (2, 4 + 6, 9, 10, 8), out.shape

    # Pure-JAX reference: trilinear (align_corners=True) upsample + pad + concat.
    wz = jnp.asarray(_interp_matrix_np(8, 4))
    wy = jnp.asarray(_interp_matrix_np(8, 4))
    wx = jnp.asarray(_interp_matrix_np(8, 4))
    ref_up = jnp.einsum("ncdhw,Dd,Hh,Ww->ncDHW", x1, wz, wy, wx)
    ref_pad = jnp.pad(ref_up, ((0, 0), (0, 0), (0, 1), (1, 1), (0, 0)))
    ref = jnp.concatenate([ref_pad, x2], axis=1)
    assert jnp.allclose(out, ref, atol=1e-4, rtol=1e-4), \
        float(jnp.max(jnp.abs(out - ref)))

    print("KERNEL_OK")
</pallas_src>

<mosaic_0001>
module attributes {stable_mosaic.version = 11 : i64} {
  func.func @_up_concat_kernel(%arg0: i32, %arg1: memref<16x80xf32, #tpu.memory_space<vmem>>, %arg2: memref<1x4x4x16xf32, #tpu.memory_space<vmem>>, %arg3: memref<1x6x9x80xf32, #tpu.memory_space<vmem>>, %arg4: memref<1x10x9x80xf32, #tpu.memory_space<vmem>>) attributes {dimension_semantics = [#tpu.dimension_semantics<parallel>], iteration_bounds = array<i64: 2>, scalar_prefetch = 0 : i64, scratch_operands = 0 : i64, tpu.core_type = #tpu.core_type<tc>, window_params = [{pipeline_mode = #tpu.pipeline_mode<synchronous>, transform_indices = @transform_0, window_bounds = array<i64: 16, 80>}, {transform_indices = @transform_1, window_bounds = array<i64: 1, 4, 4, 16>}, {transform_indices = @transform_2, window_bounds = array<i64: 1, 6, 9, 80>}, {transform_indices = @transform_3, window_bounds = array<i64: 1, 10, 9, 80>}]} {
    %c0 = arith.constant 0 : index
    %c0_0 = arith.constant 0 : index
    %c0_1 = arith.constant 0 : index
    %c0_2 = arith.constant 0 : index
    %0 = vector.load %arg3[%c0, %c0_0, %c0_1, %c0_2] : memref<1x6x9x80xf32, #tpu.memory_space<vmem>>, vector<1x6x9x80xf32>
    %c0_3 = arith.constant 0 : index
    %c4 = arith.constant 4 : index
    %c0_4 = arith.constant 0 : index
    %c0_5 = arith.constant 0 : index
    %1 = vector.load %arg4[%c0_3, %c4, %c0_4, %c0_5] : memref<1x10x9x80xf32, #tpu.memory_space<vmem>>, vector<1x6x9x80xf32>
    tpu.vector_store %arg4[%c0_3, %c4, %c0_4, %c0_5], %0 {strides = array<i32>} : memref<1x10x9x80xf32, #tpu.memory_space<vmem>>, vector<1x6x9x80xf32>,
    %c0_6 = arith.constant 0 : index
    %c0_7 = arith.constant 0 : index
    %2 = vector.load %arg1[%c0_6, %c0_7] : memref<16x80xf32, #tpu.memory_space<vmem>>, vector<16x80xf32>
    %cst = arith.constant 0.000000e+00 : f32
    %3 = vector.broadcast %cst : f32 to vector<4x80xf32>
    %c0_8 = arith.constant 0 : index
    %c0_9 = arith.constant 0 : index
    %c0_10 = arith.constant 0 : index
    %c0_11 = arith.constant 0 : index
    %4 = vector.load %arg2[%c0_8, %c0_9, %c0_10, %c0_11] : memref<1x4x4x16xf32, #tpu.memory_space<vmem>>, vector<1x4x1x16xf32>
    %5 = vector.shape_cast %4 : vector<1x4x1x16xf32> to vector<4x16xf32>
    %cst_12 = arith.constant dense<0.000000e+00> : vector<4x80xf32>
    %6 = tpu.matmul %5, %2, %cst_12 {dimension_numbers = #tpu.dot_dimension_numbers<[1], [0], [0], [1], [0, 0, 1, 1], [], []>} : vector<4x16xf32>, vector<16x80xf32>, vector<4x80xf32> -> vector<4x80xf32>
    %c0_13 = arith.constant 0 : index
    %c0_14 = arith.constant 0 : index
    %c0_15 = arith.constant 0 : index
    %c0_16 = arith.constant 0 : index
    %7 = vector.load %arg4[%c0_13, %c0_14, %c0_15, %c0_16] : memref<1x10x9x80xf32, #tpu.memory_space<vmem>>, vector<1x4x1x80xf32>
    %8 = vector.shape_cast %7 : vector<1x4x1x80xf32> to vector<4x80xf32>
    %9 = vector.shape_cast %6 : vector<4x80xf32> to vector<1x4x1x80xf32>
    tpu.vector_store %arg4[%c0_13, %c0_14, %c0_15, %c0_16], %9 {strides = array<i32>} : memref<1x10x9x80xf32, #tpu.memory_space<vmem>>, vector<1x4x1x80xf32>,
    %c0_17 = arith.constant 0 : index
    %c0_18 = arith.constant 0 : index
    %c0_19 = arith.constant 0 : index
    %c0_20 = arith.constant 0 : index
    %10 = vector.load %arg2[%c0_17, %c0_18, %c0_19, %c0_20] : memref<1x4x4x16xf32, #tpu.memory_space<vmem>>, vector<1x4x1x16xf32>
    %11 = vector.shape_cast %10 : vector<1x4x1x16xf32> to vector<4x16xf32>
    %cst_21 = arith.constant 0.571428597 : f32
    %12 = vector.broadcast %cst_21 : f32 to vector<4x16xf32>
    %13 = arith.mulf %11, %12 : vector<4x16xf32>
    %c0_22 = arith.constant 0 : index
    %c0_23 = arith.constant 0 : index
    %c1 = arith.constant 1 : index
    %c0_24 = arith.constant 0 : index
    %14 = vector.load %arg2[%c0_22, %c0_23, %c1, %c0_24] : memref<1x4x4x16xf32, #tpu.memory_space<vmem>>, vector<1x4x1x16xf32>
    %15 = vector.shape_cast %14 : vector<1x4x1x16xf32> to vector<4x16xf32>
    %cst_25 = arith.constant 0.428571433 : f32
    %16 = vector.broadcast %cst_25 : f32 to vector<4x16xf32>
    %17 = arith.mulf %15, %16 : vector<4x16xf32>
    %18 = arith.addf %13, %17 : vector<4x16xf32>
    %cst_26 = arith.constant dense<0.000000e+00> : vector<4x80xf32>
    %19 = tpu.matmul %18, %2, %cst_26 {dimension_numbers = #tpu.dot_dimension_numbers<[1], [0], [0], [1], [0, 0, 1, 1], [], []>} : vector<4x16xf32>, vector<16x80xf32>, vector<4x80xf32> -> vector<4x80xf32>
    %c0_27 = arith.constant 0 : index
    %c0_28 = arith.constant 0 : index
    %c1_29 = arith.constant 1 : index
    %c0_30 = arith.constant 0 : index
    %20 = vector.load %arg4[%c0_27, %c0_28, %c1_29, %c0_30] : memref<1x10x9x80xf32, #tpu.memory_space<vmem>>, vector<1x4x1x80xf32>
    %21 = vector.shape_cast %20 : vector<1x4x1x80xf32> to vector<4x80xf32>
    %22 = vector.shape_cast %19 : vector<4x80xf32> to vector<1x4x1x80xf32>
    tpu.vector_store %arg4[%c0_27, %c0_28, %c1_29, %c0_30], %22 {strides = array<i32>} : memref<1x10x9x80xf32, #tpu.memory_space<vmem>>, vector<1x4x1x80xf32>,
    %c0_31 = arith.constant 0 : index
    %c0_32 = arith.constant 0 : index
    %c0_33 = arith.constant 0 : index
    %c0_34 = arith.constant 0 : index
    %23 = vector.load %arg2[%c0_31, %c0_32, %c0_33, %c0_34] : memref<1x4x4x16xf32, #tpu.memory_space<vmem>>, vector<1x4x1x16xf32>
    %24 = vector.shape_cast %23 : vector<1x4x1x16xf32> to vector<4x16xf32>
    %cst_35 = arith.constant 0.142857149 : f32
    %25 = vector.broadcast %cst_35 : f32 to vector<4x16xf32>
    %26 = arith.mulf %24, %25 : vector<4x16xf32>
    %c0_36 = arith.constant 0 : index
    %c0_37 = arith.constant 0 : index
    %c1_38 = arith.constant 1 : index
    %c0_39 = arith.constant 0 : index
    %27 = vector.load %arg2[%c0_36, %c0_37, %c1_38, %c0_39] : memref<1x4x4x16xf32, #tpu.memory_space<vmem>>, vector<1x4x1x16xf32>
    %28 = vector.shape_cast %27 : vector<1x4x1x16xf32> to vector<4x16xf32>
    %cst_40 = arith.constant 0.857142865 : f32
    %29 = vector.broadcast %cst_40 : f32 to vector<4x16xf32>
    %30 = arith.mulf %28, %29 : vector<4x16xf32>
    %31 = arith.addf %26, %30 : vector<4x16xf32>
    %cst_41 = arith.constant dense<0.000000e+00> : vector<4x80xf32>
    %32 = tpu.matmul %31, %2, %cst_41 {dimension_numbers = #tpu.dot_dimension_numbers<[1], [0], [0], [1], [0, 0, 1, 1], [], []>} : vector<4x16xf32>, vector<16x80xf32>, vector<4x80xf32> -> vector<4x80xf32>
    %c0_42 = arith.constant 0 : index
    %c0_43 = arith.constant 0 : index
    %c2 = arith.constant 2 : index
    %c0_44 = arith.constant 0 : index
    %33 = vector.load %arg4[%c0_42, %c0_43, %c2, %c0_44] : memref<1x10x9x80xf32, #tpu.memory_space<vmem>>, vector<1x4x1x80xf32>
    %34 = vector.shape_cast %33 : vector<1x4x1x80xf32> to vector<4x80xf32>
    %35 = vector.shape_cast %32 : vector<4x80xf32> to vector<1x4x1x80xf32>
    tpu.vector_store %arg4[%c0_42, %c0_43, %c2, %c0_44], %35 {strides = array<i32>} : memref<1x10x9x80xf32, #tpu.memory_space<vmem>>, vector<1x4x1x80xf32>,
    %c0_45 = arith.constant 0 : index
    %c0_46 = arith.constant 0 : index
    %c1_47 = arith.constant 1 : index
    %c0_48 = arith.constant 0 : index
    %36 = vector.load %arg2[%c0_45, %c0_46, %c1_47, %c0_48] : memref<1x4x4x16xf32, #tpu.memory_space<vmem>>, vector<1x4x1x16xf32>
    %37 = vector.shape_cast %36 : vector<1x4x1x16xf32> to vector<4x16xf32>
    %cst_49 = arith.constant 0.714285731 : f32
    %38 = vector.broadcast %cst_49 : f32 to vector<4x16xf32>
    %39 = arith.mulf %37, %38 : vector<4x16xf32>
    %c0_50 = arith.constant 0 : index
    %c0_51 = arith.constant 0 : index
    %c2_52 = arith.constant 2 : index
    %c0_53 = arith.constant 0 : index
    %40 = vector.load %arg2[%c0_50, %c0_51, %c2_52, %c0_53] : memref<1x4x4x16xf32, #tpu.memory_space<vmem>>, vector<1x4x1x16xf32>
    %41 = vector.shape_cast %40 : vector<1x4x1x16xf32> to vector<4x16xf32>
    %cst_54 = arith.constant 0.285714298 : f32
    %42 = vector.broadcast %cst_54 : f32 to vector<4x16xf32>
    %43 = arith.mulf %41, %42 : vector<4x16xf32>
    %44 = arith.addf %39, %43 : vector<4x16xf32>
    %cst_55 = arith.constant dense<0.000000e+00> : vector<4x80xf32>
    %45 = tpu.matmul %44, %2, %cst_55 {dimension_numbers = #tpu.dot_dimension_numbers<[1], [0], [0], [1], [0, 0, 1, 1], [], []>} : vector<4x16xf32>, vector<16x80xf32>, vector<4x80xf32> -> vector<4x80xf32>
    %c0_56 = arith.constant 0 : index
    %c0_57 = arith.constant 0 : index
    %c3 = arith.constant 3 : index
    %c0_58 = arith.constant 0 : index
    %46 = vector.load %arg4[%c0_56, %c0_57, %c3, %c0_58] : memref<1x10x9x80xf32, #tpu.memory_space<vmem>>, vector<1x4x1x80xf32>
    %47 = vector.shape_cast %46 : vector<1x4x1x80xf32> to vector<4x80xf32>
    %48 = vector.shape_cast %45 : vector<4x80xf32> to vector<1x4x1x80xf32>
    tpu.vector_store %arg4[%c0_56, %c0_57, %c3, %c0_58], %48 {strides = array<i32>} : memref<1x10x9x80xf32, #tpu.memory_space<vmem>>, vector<1x4x1x80xf32>,
    %c0_59 = arith.constant 0 : index
    %c0_60 = arith.constant 0 : index
    %c1_61 = arith.constant 1 : index
    %c0_62 = arith.constant 0 : index
    %49 = vector.load %arg2[%c0_59, %c0_60, %c1_61, %c0_62] : memref<1x4x4x16xf32, #tpu.memory_space<vmem>>, vector<1x4x1x16xf32>
    %50 = vector.shape_cast %49 : vector<1x4x1x16xf32> to vector<4x16xf32>
    %cst_63 = arith.constant 0.285714298 : f32
    %51 = vector.broadcast %cst_63 : f32 to vector<4x16xf32>
    %52 = arith.mulf %50, %51 : vector<4x16xf32>
    %c0_64 = arith.constant 0 : index
    %c0_65 = arith.constant 0 : index
    %c2_66 = arith.constant 2 : index
    %c0_67 = arith.constant 0 : index
    %53 = vector.load %arg2[%c0_64, %c0_65, %c2_66, %c0_67] : memref<1x4x4x16xf32, #tpu.memory_space<vmem>>, vector<1x4x1x16xf32>
    %54 = vector.shape_cast %53 : vector<1x4x1x16xf32> to vector<4x16xf32>
    %cst_68 = arith.constant 0.714285731 : f32
    %55 = vector.broadcast %cst_68 : f32 to vector<4x16xf32>
    %56 = arith.mulf %54, %55 : vector<4x16xf32>
    %57 = arith.addf %52, %56 : vector<4x16xf32>
    %cst_69 = arith.constant dense<0.000000e+00> : vector<4x80xf32>
    %58 = tpu.matmul %57, %2, %cst_69 {dimension_numbers = #tpu.dot_dimension_numbers<[1], [0], [0], [1], [0, 0, 1, 1], [], []>} : vector<4x16xf32>, vector<16x80xf32>, vector<4x80xf32> -> vector<4x80xf32>
    %c0_70 = arith.constant 0 : index
    %c0_71 = arith.constant 0 : index
    %c4_72 = arith.constant 4 : index
    %c0_73 = arith.constant 0 : index
    %59 = vector.load %arg4[%c0_70, %c0_71, %c4_72, %c0_73] : memref<1x10x9x80xf32, #tpu.memory_space<vmem>>, vector<1x4x1x80xf32>
    %60 = vector.shape_cast %59 : vector<1x4x1x80xf32> to vector<4x80xf32>
    %61 = vector.shape_cast %58 : vector<4x80xf32> to vector<1x4x1x80xf32>
    tpu.vector_store %arg4[%c0_70, %c0_71, %c4_72, %c0_73], %61 {strides = array<i32>} : memref<1x10x9x80xf32, #tpu.memory_space<vmem>>, vector<1x4x1x80xf32>,
    %c0_74 = arith.constant 0 : index
    %c0_75 = arith.constant 0 : index
    %c2_76 = arith.constant 2 : index
    %c0_77 = arith.constant 0 : index
    %62 = vector.load %arg2[%c0_74, %c0_75, %c2_76, %c0_77] : memref<1x4x4x16xf32, #tpu.memory_space<vmem>>, vector<1x4x1x16xf32>
    %63 = vector.shape_cast %62 : vector<1x4x1x16xf32> to vector<4x16xf32>
    %cst_78 = arith.constant 0.857142865 : f32
    %64 = vector.broadcast %cst_78 : f32 to vector<4x16xf32>
    %65 = arith.mulf %63, %64 : vector<4x16xf32>
    %c0_79 = arith.constant 0 : index
    %c0_80 = arith.constant 0 : index
    %c3_81 = arith.constant 3 : index
    %c0_82 = arith.constant 0 : index
    %66 = vector.load %arg2[%c0_79, %c0_80, %c3_81, %c0_82] : memref<1x4x4x16xf32, #tpu.memory_space<vmem>>, vector<1x4x1x16xf32>
    %67 = vector.shape_cast %66 : vector<1x4x1x16xf32> to vector<4x16xf32>
    %cst_83 = arith.constant 0.142857149 : f32
    %68 = vector.broadcast %cst_83 : f32 to vector<4x16xf32>
    %69 = arith.mulf %67, %68 : vector<4x16xf32>
    %70 = arith.addf %65, %69 : vector<4x16xf32>
    %cst_84 = arith.constant dense<0.000000e+00> : vector<4x80xf32>
    %71 = tpu.matmul %70, %2, %cst_84 {dimension_numbers = #tpu.dot_dimension_numbers<[1], [0], [0], [1], [0, 0, 1, 1], [], []>} : vector<4x16xf32>, vector<16x80xf32>, vector<4x80xf32> -> vector<4x80xf32>
    %c0_85 = arith.constant 0 : index
    %c0_86 = arith.constant 0 : index
    %c5 = arith.constant 5 : index
    %c0_87 = arith.constant 0 : index
    %72 = vector.load %arg4[%c0_85, %c0_86, %c5, %c0_87] : memref<1x10x9x80xf32, #tpu.memory_space<vmem>>, vector<1x4x1x80xf32>
    %73 = vector.shape_cast %72 : vector<1x4x1x80xf32> to vector<4x80xf32>
    %74 = vector.shape_cast %71 : vector<4x80xf32> to vector<1x4x1x80xf32>
    tpu.vector_store %arg4[%c0_85, %c0_86, %c5, %c0_87], %74 {strides = array<i32>} : memref<1x10x9x80xf32, #tpu.memory_space<vmem>>, vector<1x4x1x80xf32>,
    %c0_88 = arith.constant 0 : index
    %c0_89 = arith.constant 0 : index
    %c2_90 = arith.constant 2 : index
    %c0_91 = arith.constant 0 : index
    %75 = vector.load %arg2[%c0_88, %c0_89, %c2_90, %c0_91] : memref<1x4x4x16xf32, #tpu.memory_space<vmem>>, vector<1x4x1x16xf32>
    %76 = vector.shape_cast %75 : vector<1x4x1x16xf32> to vector<4x16xf32>
    %cst_92 = arith.constant 0.428571433 : f32
    %77 = vector.broadcast %cst_92 : f32 to vector<4x16xf32>
    %78 = arith.mulf %76, %77 : vector<4x16xf32>
    %c0_93 = arith.constant 0 : index
    %c0_94 = arith.constant 0 : index
    %c3_95 = arith.constant 3 : index
    %c0_96 = arith.constant 0 : index
    %79 = vector.load %arg2[%c0_93, %c0_94, %c3_95, %c0_96] : memref<1x4x4x16xf32, #tpu.memory_space<vmem>>, vector<1x4x1x16xf32>
    %80 = vector.shape_cast %79 : vector<1x4x1x16xf32> to vector<4x16xf32>
    %cst_97 = arith.constant 0.571428597 : f32
    %81 = vector.broadcast %cst_97 : f32 to vector<4x16xf32>
    %82 = arith.mulf %80, %81 : vector<4x16xf32>
    %83 = arith.addf %78, %82 : vector<4x16xf32>
    %cst_98 = arith.constant dense<0.000000e+00> : vector<4x80xf32>
    %84 = tpu.matmul %83, %2, %cst_98 {dimension_numbers = #tpu.dot_dimension_numbers<[1], [0], [0], [1], [0, 0, 1, 1], [], []>} : vector<4x16xf32>, vector<16x80xf32>, vector<4x80xf32> -> vector<4x80xf32>
    %c0_99 = arith.constant 0 : index
    %c0_100 = arith.constant 0 : index
    %c6 = arith.constant 6 : index
    %c0_101 = arith.constant 0 : index
    %85 = vector.load %arg4[%c0_99, %c0_100, %c6, %c0_101] : memref<1x10x9x80xf32, #tpu.memory_space<vmem>>, vector<1x4x1x80xf32>
    %86 = vector.shape_cast %85 : vector<1x4x1x80xf32> to vector<4x80xf32>
    %87 = vector.shape_cast %84 : vector<4x80xf32> to vector<1x4x1x80xf32>
    tpu.vector_store %arg4[%c0_99, %c0_100, %c6, %c0_101], %87 {strides = array<i32>} : memref<1x10x9x80xf32, #tpu.memory_space<vmem>>, vector<1x4x1x80xf32>,
    %c0_102 = arith.constant 0 : index
    %c0_103 = arith.constant 0 : index
    %c3_104 = arith.constant 3 : index
    %c0_105 = arith.constant 0 : index
    %88 = vector.load %arg2[%c0_102, %c0_103, %c3_104, %c0_105] : memref<1x4x4x16xf32, #tpu.memory_space<vmem>>, vector<1x4x1x16xf32>
    %89 = vector.shape_cast %88 : vector<1x4x1x16xf32> to vector<4x16xf32>
    %cst_106 = arith.constant dense<0.000000e+00> : vector<4x80xf32>
    %90 = tpu.matmul %89, %2, %cst_106 {dimension_numbers = #tpu.dot_dimension_numbers<[1], [0], [0], [1], [0, 0, 1, 1], [], []>} : vector<4x16xf32>, vector<16x80xf32>, vector<4x80xf32> -> vector<4x80xf32>
    %c0_107 = arith.constant 0 : index
    %c0_108 = arith.constant 0 : index
    %c7 = arith.constant 7 : index
    %c0_109 = arith.constant 0 : index
    %91 = vector.load %arg4[%c0_107, %c0_108, %c7, %c0_109] : memref<1x10x9x80xf32, #tpu.memory_space<vmem>>, vector<1x4x1x80xf32>
    %92 = vector.shape_cast %91 : vector<1x4x1x80xf32> to vector<4x80xf32>
    %93 = vector.shape_cast %90 : vector<4x80xf32> to vector<1x4x1x80xf32>
    tpu.vector_store %arg4[%c0_107, %c0_108, %c7, %c0_109], %93 {strides = array<i32>} : memref<1x10x9x80xf32, #tpu.memory_space<vmem>>, vector<1x4x1x80xf32>,
    %c0_110 = arith.constant 0 : index
    %c0_111 = arith.constant 0 : index
    %c8 = arith.constant 8 : index
    %c0_112 = arith.constant 0 : index
    %94 = vector.load %arg4[%c0_110, %c0_111, %c8, %c0_112] : memref<1x10x9x80xf32, #tpu.memory_space<vmem>>, vector<1x4x1x80xf32>
    %95 = vector.shape_cast %94 : vector<1x4x1x80xf32> to vector<4x80xf32>
    %96 = vector.shape_cast %3 : vector<4x80xf32> to vector<1x4x1x80xf32>
    tpu.vector_store %arg4[%c0_110, %c0_111, %c8, %c0_112], %96 {strides = array<i32>} : memref<1x10x9x80xf32, #tpu.memory_space<vmem>>, vector<1x4x1x80xf32>,
    return
  }
  func.func @transform_0(%arg0: i32) -> (i32, i32) {
    %c0_i32 = arith.constant 0 : i32
    %c0_i32_0 = arith.constant 0 : i32
    %c0_i32_1 = arith.constant 0 : i32
    return %c0_i32, %c0_i32_0 : i32, i32
  }
  func.func @transform_1(%arg0: i32) -> (i32, i32, i32, i32) {
    %c0_i32 = arith.constant 0 : i32
    %c0_i32_0 = arith.constant 0 : i32
    %c0_i32_1 = arith.constant 0 : i32
    %c0_i32_2 = arith.constant 0 : i32
    return %arg0, %c0_i32, %c0_i32_0, %c0_i32_1 : i32, i32, i32, i32
  }
  func.func @transform_2(%arg0: i32) -> (i32, i32, i32, i32) {
    %c0_i32 = arith.constant 0 : i32
    %c0_i32_0 = arith.constant 0 : i32
    %c0_i32_1 = arith.constant 0 : i32
    %c0_i32_2 = arith.constant 0 : i32
    return %arg0, %c0_i32, %c0_i32_0, %c0_i32_1 : i32, i32, i32, i32
  }
  func.func @transform_3(%arg0: i32) -> (i32, i32, i32, i32) {
    %c0_i32 = arith.constant 0 : i32
    %c0_i32_0 = arith.constant 0 : i32
    %c0_i32_1 = arith.constant 0 : i32
    %c0_i32_2 = arith.constant 0 : i32
    return %arg0, %c0_i32, %c0_i32_0, %c0_i32_1 : i32, i32, i32, i32
  }
}

</mosaic_0001>

<llo_original>
// kernel: up_concat.1
$region0: #{up_concat.1}
  #allocation0 [shape = 'u32[]', space=smem, size = 0x4, offset = 0x4, fixed_abs, tag = 'smem constant byte address 0x4 - core index']
  #allocation1 [shape = 'u32[72,128]{1,0:T(1,128)}', space=vmem, size = 0x9000, scoped, tag = 'internal scratch']
  %s0 = inlined_call_operand.vmem [shape: f32[16,80], index: 0, kind: input, shape index: {}]
  %s1 = inlined_call_operand.vmem [shape: f32[2,4,4,16], index: 1, kind: input, shape index: {}]
  %s2 = inlined_call_operand.vmem [shape: f32[2,6,9,80], index: 2, kind: input, shape index: {}]
  %s3 = inlined_call_operand.vmem [shape: f32[2,10,9,80], index: 3, kind: output, shape index: {}]
  %s4 = sld [smem:[#allocation0]]
  $region45: #{up_concat.1} parent=0
    _
  %s6 = ssub.s32 1, %s4
  %s7 = scalar_select 0, %s6, %s4
  loop: start=0, step=1, limit=4
  $region2: #{up_concat.1} parent=0 // loop_pre_header
    _
  $region3: #{up_concat.1} parent=0 // loop_header
    %s9 = sphi 0, %s13
    %p10 = scmp.ge.s32.totalorder %s9, 4
    %s17 = sphi 0, %s17
    %s19 = sphi 0, %s17
    %s20 = sphi 0, %s19
    %s34 = sphi 0, %s20
    %s40 = sphi 0, %s42
    %s43 = sphi 0, %s40
    %s44 = sphi 0, %s43
    %s60 = sphi 0, %s44
    %s66 = sphi 0, %s68
    %s69 = sphi 0, %s66
    %s70 = sphi 0, %s69
    %s86 = sphi 0, %s70
    %s92 = sphi 0, %s94
    %s95 = sphi 0, %s92
    %s96 = sphi 0, %s95
    %s112 = sphi 0, %s96
  $region4: #{up_concat.1} parent=0 // loop_header_branch
    %12 = sbr.rel (%p10) target = $region8
  $region5: #{up_concat.1} parent=0 // loop_body
    %s14 = ssub.s32 %s9, 1
    %s15 = ssub.s32 %s9, 2
    %s16 = sadd.s32 %s9, 1
    %s18 = sadd.s32 %s17, 1
    %p21 = scmp.eq.s32.totalorder %s9, 1
    %p22 = scmp.ne.s32.totalorder %s17, %s19
    %p23 = scmp.eq.s32.totalorder %s9, 0
    %p24 = por %p22, %p23
    %p25 = scmp.ne.s32.totalorder %s17, %s19
    %p26 = scmp.eq.s32.totalorder %s14, 1
    %p27 = por %p25, %p26
    %p28 = scmp.ne.s32.totalorder %s19, %s20
    %p29 = scmp.eq.s32.totalorder %s14, 0
    %p30 = por %p28, %p29
    %p31 = scmp.ne.s32.totalorder %s19, %s20
    %p32 = scmp.eq.s32.totalorder %s15, 1
    %p33 = por %p31, %p32
    %p35 = scmp.ne.s32.totalorder %s20, %s34
    %p36 = scmp.eq.s32.totalorder %s15, 0
    %p37 = por %p35, %p36
    %s38 = ssub.s32 %s9, %s16
    %p39 = scmp.eq.s32.totalorder %s38, 0
    %s41 = sadd.s32 %s40, 1
    %s42 = scalar_select %p39, %s40, %s41
    %p45 = pneg %p39
    %p46 = scmp.eq.s32.totalorder %s9, 1
    %p47 = por %p45, %p46
    %p48 = scmp.ne.s32.totalorder %s40, %s43
    %p49 = scmp.eq.s32.totalorder %s9, 0
    %p50 = por %p48, %p49
    %p51 = scmp.ne.s32.totalorder %s40, %s43
    %p52 = scmp.eq.s32.totalorder %s14, 1
    %p53 = por %p51, %p52
    %p54 = scmp.ne.s32.totalorder %s43, %s44
    %p55 = scmp.eq.s32.totalorder %s14, 0
    %p56 = por %p54, %p55
    %p57 = scmp.ne.s32.totalorder %s43, %s44
    %p58 = scmp.eq.s32.totalorder %s15, 1
    %p59 = por %p57, %p58
    %p61 = scmp.ne.s32.totalorder %s44, %s60
    %p62 = scmp.eq.s32.totalorder %s15, 0
    %p63 = por %p61, %p62
    %s64 = ssub.s32 %s9, %s16
    %p65 = scmp.eq.s32.totalorder %s64, 0
    %s67 = sadd.s32 %s66, 1
    %s68 = scalar_select %p65, %s66, %s67
    %p71 = pneg %p65
    %p72 = scmp.eq.s32.totalorder %s9, 1
    %p73 = por %p71, %p72
    %p74 = scmp.ne.s32.totalorder %s66, %s69
    %p75 = scmp.eq.s32.totalorder %s9, 0
    %p76 = por %p74, %p75
    %p77 = scmp.ne.s32.totalorder %s66, %s69
    %p78 = scmp.eq.s32.totalorder %s14, 1
    %p79 = por %p77, %p78
    %p80 = scmp.ne.s32.totalorder %s69, %s70
    %p81 = scmp.eq.s32.totalorder %s14, 0
    %p82 = por %p80, %p81
    %p83 = scmp.ne.s32.totalorder %s69, %s70
    %p84 = scmp.eq.s32.totalorder %s15, 1
    %p85 = por %p83, %p84
    %p87 = scmp.ne.s32.totalorder %s70, %s86
    %p88 = scmp.eq.s32.totalorder %s15, 0
    %p89 = por %p87, %p88
    %s90 = ssub.s32 %s9, %s16
    %p91 = scmp.eq.s32.totalorder %s90, 0
    %s93 = sadd.s32 %s92, 1
    %s94 = scalar_select %p91, %s92, %s93
    %p97 = pneg %p91
    %p98 = scmp.eq.s32.totalorder %s9, 1
    %p99 = por %p97, %p98
    %p100 = scmp.ne.s32.totalorder %s92, %s95
    %p101 = scmp.eq.s32.totalorder %s9, 0
    %p102 = por %p100, %p101
    %p103 = scmp.ne.s32.totalorder %s92, %s95
    %p104 = scmp.eq.s32.totalorder %s14, 1
    %p105 = por %p103, %p104
    %p106 = scmp.ne.s32.totalorder %s95, %s96
    %p107 = scmp.eq.s32.totalorder %s14, 0
    %p108 = por %p106, %p107
    %p109 = scmp.ne.s32.totalorder %s95, %s96
    %p110 = scmp.eq.s32.totalorder %s15, 1
    %p111 = por %p109, %p110
    %p113 = scmp.ne.s32.totalorder %s96, %s112
    %p114 = scmp.eq.s32.totalorder %s15, 0
    %p115 = por %p113, %p114
    %p116 = scmp.le.s32.totalorder 1, %s9
    %p117 = scmp.lt.s32.totalorder %s9, 3
    %p118 = pnand %p116, %p117
    %p119 = pneg %p118
    // Predicated region
    $region9: #{up_concat.1} parent=5 // pred_check
      _
    $region10: #{up_concat.1} parent=5 // pred_check_branch
      %121 = sbr.rel (%p118) target = $region12
    $region11: #{up_concat.1} parent=5 // pred_region
      %s122 = ssub.s32 %s9, 1
      // Predicated region
      $region13: #{up_concat.1} parent=11 // pred_check
        %p123 = pneg %p30
      $region14: #{up_concat.1} parent=11 // pred_check_branch
        %125 = sbr.rel (%p123) target = $region16
      $region15: #{up_concat.1} parent=11 // pred_region
        _
      $region16: #{up_concat.1} parent=11 // pred_fallthru
        _
    $region12: #{up_concat.1} parent=5 // pred_fallthru
      _
    %p126 = scmp.lt.s32.totalorder %s9, 2
    // Predicated region
    $region17: #{up_concat.1} parent=5 // pred_check
      %p127 = pneg %p126
    $region18: #{up_concat.1} parent=5 // pred_check_branch
      %129 = sbr.rel (%p127) target = $region20
    $region19: #{up_concat.1} parent=5 // pred_region
      // Predicated region
      $region21: #{up_concat.1} parent=19 // pred_check
        %p130 = pneg %p50
      $region22: #{up_concat.1} parent=19 // pred_check_branch
        %132 = sbr.rel (%p130) target = $region24
      $region23: #{up_concat.1} parent=19 // pred_region
        %p133 = scmp.lt.s32.totalorder %s9, 1
        %s134 = scalar_select %p133, %s9, 1
        %s135 = smul.addr %s134, 4
        %s136 = smul.addr %s135, 4
        %s137 = scalar_lea.vmem %s1, %s136
      $region24: #{up_concat.1} parent=19 // pred_fallthru
        _
      // Predicated region
      $region25: #{up_concat.1} parent=19 // pred_check
        %p138 = pneg %p76
      $region26: #{up_concat.1} parent=19 // pred_check_branch
        %140 = sbr.rel (%p138) target = $region28
      $region27: #{up_concat.1} parent=19 // pred_region
        %p141 = scmp.lt.s32.totalorder %s9, 1
        %s142 = scalar_select %p141, %s9, 1
        %s143 = smul.addr %s142, 12
        %s144 = smul.addr %s143, 8
        %s145 = scalar_lea.vmem %s2, %s144
      $region28: #{up_concat.1} parent=19 // pred_fallthru
        _
    $region20: #{up_concat.1} parent=5 // pred_fallthru
      _
    %p146 = scmp.le.s32.totalorder 1, %s9
    %p147 = scmp.lt.s32.totalorder %s9, 3
    %p148 = pnand %p146, %p147
    %p149 = pneg %p148
    // Predicated region
    $region29: #{up_concat.1} parent=5 // pred_check
      _
    $region30: #{up_concat.1} parent=5 // pred_check_branch
      %151 = sbr.rel (%p148) target = $region32
    $region31: #{up_concat.1} parent=5 // pred_region
      %s152 = ssub.s32 %s9, 1
      %p153 = pneg %p30
      %p154 = pneg %p27
      %p155 = scmp.lt.s32.totalorder %s14, 1
      %s156 = scalar_select %p155, %s14, 1
      %s157 = smul.addr %s156, 4
      %s158 = smul.addr %s157, 4
      %s159 = scalar_lea.vmem %s1, %s158
      %p160 = pneg %p56
      %p161 = pneg %p53
      %p162 = scmp.lt.s32.totalorder %s14, 1
      %s163 = scalar_select %p162, %s14, 1
      %s164 = smul.addr %s163, 12
      %s165 = smul.addr %s164, 8
      %s166 = scalar_lea.vmem %s2, %s165
      %p167 = pneg %p82
      %p168 = pneg %p79
      %p169 = pneg %p108
      %p170 = pneg %p105
      %p171 = scmp.lt.s32.totalorder %s14, 1
      %s172 = scalar_select %p171, %s14, 1
      %s173 = smul.addr %s172, 20
      %s174 = smul.addr %s173, 8
      %s175 = scalar_lea.vmem %s3, %s174
      %p176 = scmp.lt.s32.totalorder %s14, 1
      %s177 = scalar_select %p176, %s14, 1
      %s178 = smul.addr %s177, 4
      %s179 = smul.addr %s178, 4
      %s180 = scalar_lea.vmem %s1, %s179
      %p181 = scmp.lt.s32.totalorder %s14, 1
      %s182 = scalar_select %p181, %s14, 1
      %s183 = smul.addr %s182, 12
      %s184 = smul.addr %s183, 8
      %s185 = scalar_lea.vmem %s2, %s184
      %p186 = scmp.lt.s32.totalorder %s14, 1
      %s187 = scalar_select %p186, %s14, 1
      %s188 = smul.addr %s187, 20
      %s189 = smul.addr %s188, 8
      %s190 = scalar_lea.vmem %s3, %s189
      %v191 = vld [vmem:[%s185] sm:$0xff]
      %v192 = vld [vmem:[%s185 + $0x8] sm:$0x1]
      %v193 = vld [vmem:[%s185 + $0x10] sm:$0xff]
      %v194 = vld [vmem:[%s185 + $0x18] sm:$0x1]
      %v195 = vld [vmem:[%s185 + $0x20] sm:$0xff]
      %v196 = vld [vmem:[%s185 + $0x28] sm:$0x1]
      %v197 = vld [vmem:[%s185 + $0x30] sm:$0xff]
      %v198 = vld [vmem:[%s185 + $0x38] sm:$0x1]
      %v199 = vld [vmem:[%s185 + $0x40] sm:$0xff]
      %v200 = vld [vmem:[%s185 + $0x48] sm:$0x1]
      %v201 = vld [vmem:[%s185 + $0x50] sm:$0xff]
      %v202 = vld [vmem:[%s185 + $0x58] sm:$0x1]
      %s203 = scalar_lea.vmem %s190, 64
      %vm204 = vcmask 654336
      %205 = vst.msk [vmem:[%s203] sm:$0xff] %vm204, %v191
      %vm206 = vcmask 647168
      %207 = vst.msk [vmem:[%s203 + $0x8] sm:$0x1] %vm206, %v192
      %208 = vst.msk [vmem:[%s203 + $0x10] sm:$0xff] %vm204, %v193
      %209 = vst.msk [vmem:[%s203 + $0x18] sm:$0x1] %vm206, %v194
      %210 = vst.msk [vmem:[%s203 + $0x20] sm:$0xff] %vm204, %v195
      %211 = vst.msk [vmem:[%s203 + $0x28] sm:$0x1] %vm206, %v196
      %212 = vst.msk [vmem:[%s203 + $0x30] sm:$0xff] %vm204, %v197
      %213 = vst.msk [vmem:[%s203 + $0x38] sm:$0x1] %vm206, %v198
      %214 = vst.msk [vmem:[%s203 + $0x40] sm:$0xff] %vm204, %v199
      %215 = vst.msk [vmem:[%s203 + $0x48] sm:$0x1] %vm206, %v200
      %216 = vst.msk [vmem:[%s203 + $0x50] sm:$0xff] %vm204, %v201
      %217 = vst.msk [vmem:[%s203 + $0x58] sm:$0x1] %vm206, %v202
      %v218 = vld [vmem:[%s0] sm:$0xff]
      %v219 = vld [vmem:[%s0 + $0x8] sm:$0xff]
      %v220 = vld [vmem:[%s180] sm:$0x1]
      %v221 = vld [vmem:[%s180 + $0x4] sm:$0x1]
      %v222 = vld [vmem:[%s180 + $0x8] sm:$0x1]
      %v223 = vld [vmem:[%s180 + $0xc] sm:$0x1]
      %v228 = vrot.slane %v221, 7
      %vm229 = vcmask 1041409
      %v230 = vsel %vm229, %v228, %v220
      %v231 = vrot.slane %v222, 6
      %vm232 = vcmask 1042434
      %v233 = vsel %vm232, %v231, %v230
      %v234 = vrot.slane %v223, 5
      %vm235 = vcmask 1043459
      %v236 = vsel %vm235, %v234, %v233
      %vm237 = vcmask 130048
      %v238 = vsel %vm237, %v236, 0
      %240 = vmatpush.msra.mxu0 0.0
      %241 = vmatpush.msra.mxu0 0.0
      %242 = vmatpush.msra.mxu0 0.0
      %243 = vmatpush.msra.mxu0 0.0
      %244 = vmatpush.msra.mxu0 0.0
      %245 = vmatpush.msra.mxu0 0.0
      %246 = vmatpush.msra.mxu0 0.0
      %247 = vmatpush.msra.mxu0 0.0
      %248 = vmatpush.msra.mxu0 0.0
      %249 = vmatpush.msra.mxu0 0.0
      %250 = vmatpush.msra.mxu0 0.0
      %251 = vmatpush.msra.mxu0 0.0
      %252 = vmatpush.msra.mxu0 0.0
      %253 = vmatpush.msra.mxu0 0.0
      %254 = vmatpush.msra.mxu0 %v219
      %255 = vmatpush.msra.mxu0 %v218
      %256 = vmatmul.f32.gmra.mxu0 %v238
      %v257 = vpop.f32.mrf.mxu0
      %v258 = vadd.f32 0.0, %v257
      %259 = vdwg.mxu0
      %v261 = vrot.slane %v258, 1
      %v262 = vrot.slane %v258, 2
      %v263 = vrot.slane %v258, 3
      %267 = vst.msk [vmem:[%s190] sm:$0x1] %vm206, %v258
      %268 = vst.msk [vmem:[%s190 + $0x10] sm:$0x1] %vm206, %v261
      %269 = vst.msk [vmem:[%s190 + $0x20] sm:$0x1] %vm206, %v262
      %270 = vst.msk [vmem:[%s190 + $0x30] sm:$0x1] %vm206, %v263
      %v271 = vld [vmem:[%s180] sm:$0x1]
      %v272 = vld [vmem:[%s180 + $0x4] sm:$0x1]
      %v273 = vld [vmem:[%s180 + $0x8] sm:$0x1]
      %v274 = vld [vmem:[%s180 + $0xc] sm:$0x1]
      %v275 = vmul.f32 %v271, 0.5714286
      %v276 = vmul.f32 %v272, 0.5714286
      %v277 = vmul.f32 %v273, 0.5714286
      %v278 = vmul.f32 %v274, 0.5714286
      %v279 = vld [vmem:[%s180 + $0x1] sm:$0x1]
      %v280 = vld [vmem:[%s180 + $0x5] sm:$0x1]
      %v281 = vld [vmem:[%s180 + $0x9] sm:$0x1]
      %v282 = vld [vmem:[%s180 + $0xd] sm:$0x1]
      %v283 = vmul.f32 %v279, 0.42857143
      %v284 = vmul.f32 %v280, 0.42857143
      %v285 = vmul.f32 %v281, 0.42857143
      %v286 = vmul.f32 %v282, 0.42857143
      %v287 = vadd.f32 %v275, %v283
      %v288 = vadd.f32 %v276, %v284
      %v289 = vadd.f32 %v277, %v285
      %v290 = vadd.f32 %v278, %v286
      %v295 = vrot.slane %v288, 7
      %v296 = vsel %vm229, %v295, %v287
      %v297 = vrot.slane %v289, 6
      %v298 = vsel %vm232, %v297, %v296
      %v299 = vrot.slane %v290, 5
      %v300 = vsel %vm235, %v299, %v298
      %v301 = vsel %vm237, %v300, 0
      %303 = vmatpush.msra.mxu0 0.0
      %304 = vmatpush.msra.mxu0 0.0
      %305 = vmatpush.msra.mxu0 0.0
      %306 = vmatpush.msra.mxu0 0.0
      %307 = vmatpush.msra.mxu0 0.0
      %308 = vmatpush.msra.mxu0 0.0
      %309 = vmatpush.msra.mxu0 0.0
      %310 = vmatpush.msra.mxu0 0.0
      %311 = vmatpush.msra.mxu0 0.0
      %312 = vmatpush.msra.mxu0 0.0
      %313 = vmatpush.msra.mxu0 0.0
      %314 = vmatpush.msra.mxu0 0.0
      %315 = vmatpush.msra.mxu0 0.0
      %316 = vmatpush.msra.mxu0 0.0
      %317 = vmatpush.msra.mxu0 %v219
      %318 = vmatpush.msra.mxu0 %v218
      %319 = vmatmul.f32.gmra.mxu0 %v301
      %v320 = vpop.f32.mrf.mxu0
      %v321 = vadd.f32 0.0, %v320
      %322 = vdwg.mxu0
      %v324 = vrot.slane %v321, 1
      %v325 = vrot.slane %v321, 2
      %v326 = vrot.slane %v321, 3
      %330 = vst.msk [vmem:[%s190 + $0x1] sm:$0x1] %vm206, %v321
      %331 = vst.msk [vmem:[%s190 + $0x11] sm:$0x1] %vm206, %v324
      %332 = vst.msk [vmem:[%s190 + $0x21] sm:$0x1] %vm206, %v325
      %333 = vst.msk [vmem:[%s190 + $0x31] sm:$0x1] %vm206, %v326
      %v334 = vld [vmem:[%s180] sm:$0x1]
      %v335 = vld [vmem:[%s180 + $0x4] sm:$0x1]
      %v336 = vld [vmem:[%s180 + $0x8] sm:$0x1]
      %v337 = vld [vmem:[%s180 + $0xc] sm:$0x1]
      %v338 = vmul.f32 %v334, 0.14285715
      %v339 = vmul.f32 %v335, 0.14285715
      %v340 = vmul.f32 %v336, 0.14285715
      %v341 = vmul.f32 %v337, 0.14285715
      %v342 = vld [vmem:[%s180 + $0x1] sm:$0x1]
      %v343 = vld [vmem:[%s180 + $0x5] sm:$0x1]
      %v344 = vld [vmem:[%s180 + $0x9] sm:$0x1]
      %v345 = vld [vmem:[%s180 + $0xd] sm:$0x1]
      %v346 = vmul.f32 %v342, 0.85714287
      %v347 = vmul.f32 %v343, 0.85714287
      %v348 = vmul.f32 %v344, 0.85714287
      %v349 = vmul.f32 %v345, 0.85714287
      %v350 = vadd.f32 %v338, %v346
      %v351 = vadd.f32 %v339, %v347
      %v352 = vadd.f32 %v340, %v348
      %v353 = vadd.f32 %v341, %v349
      %v358 = vrot.slane %v351, 7
      %v359 = vsel %vm229, %v358, %v350
      %v360 = vrot.slane %v352, 6
      %v361 = vsel %vm232, %v360, %v359
      %v362 = vrot.slane %v353, 5
      %v363 = vsel %vm235, %v362, %v361
      %v364 = vsel %vm237, %v363, 0
      %366 = vmatpush.msra.mxu0 0.0
      %367 = vmatpush.msra.mxu0 0.0
      %368 = vmatpush.msra.mxu0 0.0
      %369 = vmatpush.msra.mxu0 0.0
      %370 = vmatpush.msra.mxu0 0.0
      %371 = vmatpush.msra.mxu0 0.0
      %372 = vmatpush.msra.mxu0 0.0
      %373 = vmatpush.msra.mxu0 0.0
      %374 = vmatpush.msra.mxu0 0.0
      %375 = vmatpush.msra.mxu0 0.0
      %376 = vmatpush.msra.mxu0 0.0
      %377 = vmatpush.msra.mxu0 0.0
      %378 = vmatpush.msra.mxu0 0.0
      %379 = vmatpush.msra.mxu0 0.0
      %380 = vmatpush.msra.mxu0 %v219
      %381 = vmatpush.msra.mxu0 %v218
      %382 = vmatmul.f32.gmra.mxu0 %v364
      %v383 = vpop.f32.mrf.mxu0
      %v384 = vadd.f32 0.0, %v383
      %385 = vdwg.mxu0
      %v387 = vrot.slane %v384, 1
      %v388 = vrot.slane %v384, 2
      %v389 = vrot.slane %v384, 3
      %393 = vst.msk [vmem:[%s190 + $0x2] sm:$0x1] %vm206, %v384
      %394 = vst.msk [vmem:[%s190 + $0x12] sm:$0x1] %vm206, %v387
      %395 = vst.msk [vmem:[%s190 + $0x22] sm:$0x1] %vm206, %v388
      %396 = vst.msk [vmem:[%s190 + $0x32] sm:$0x1] %vm206, %v389
      %v397 = vld [vmem:[%s180 + $0x1] sm:$0x1]
      %v398 = vld [vmem:[%s180 + $0x5] sm:$0x1]
      %v399 = vld [vmem:[%s180 + $0x9] sm:$0x1]
      %v400 = vld [vmem:[%s180 + $0xd] sm:$0x1]
      %v401 = vmul.f32 %v397, 0.71428573
      %v402 = vmul.f32 %v398, 0.71428573
      %v403 = vmul.f32 %v399, 0.71428573
      %v404 = vmul.f32 %v400, 0.71428573
      %v405 = vld [vmem:[%s180 + $0x2] sm:$0x1]
      %v406 = vld [vmem:[%s180 + $0x6] sm:$0x1]
      %v407 = vld [vmem:[%s180 + $0xa] sm:$0x1]
      %v408 = vld [vmem:[%s180 + $0xe] sm:$0x1]
      %v409 = vmul.f32 %v405, 0.2857143
      %v410 = vmul.f32 %v406, 0.2857143
      %v411 = vmul.f32 %v407, 0.2857143
      %v412 = vmul.f32 %v408, 0.2857143
      %v413 = vadd.f32 %v401, %v409
      %v414 = vadd.f32 %v402, %v410
      %v415 = vadd.f32 %v403, %v411
      %v416 = vadd.f32 %v404, %v412
      %v421 = vrot.slane %v414, 7
      %v422 = vsel %vm229, %v421, %v413
      %v423 = vrot.slane %v415, 6
      %v424 = vsel %vm232, %v423, %v422
      %v425 = vrot.slane %v416, 5
      %v426 = vsel %vm235, %v425, %v424
      %v427 = vsel %vm237, %v426, 0
      %429 = vmatpush.msra.mxu0 0.0
      %430 = vmatpush.msra.mxu0 0.0
      %431 = vmatpush.msra.mxu0 0.0
      %432 = vmatpush.msra.mxu0 0.0
      %433 = vmatpush.msra.mxu0 0.0
      %434 = vmatpush.msra.mxu0 0.0
      %435 = vmatpush.msra.mxu0 0.0
      %436 = vmatpush.msra.mxu0 0.0
      %437 = vmatpush.msra.mxu0 0.0
      %438 = vmatpush.msra.mxu0 0.0
      %439 = vmatpush.msra.mxu0 0.0
      %440 = vmatpush.msra.mxu0 0.0
      %441 = vmatpush.msra.mxu0 0.0
      %442 = vmatpush.msra.mxu0 0.0
      %443 = vmatpush.msra.mxu0 %v219
      %444 = vmatpush.msra.mxu0 %v218
      %445 = vmatmul.f32.gmra.mxu0 %v427
      %v446 = vpop.f32.mrf.mxu0
      %v447 = vadd.f32 0.0, %v446
      %448 = vdwg.mxu0
      %v450 = vrot.slane %v447, 1
      %v451 = vrot.slane %v447, 2
      %v452 = vrot.slane %v447, 3
      %456 = vst.msk [vmem:[%s190 + $0x3] sm:$0x1] %vm206, %v447
      %457 = vst.msk [vmem:[%s190 + $0x13] sm:$0x1] %vm206, %v450
      %458 = vst.msk [vmem:[%s190 + $0x23] sm:$0x1] %vm206, %v451
      %459 = vst.msk [vmem:[%s190 + $0x33] sm:$0x1] %vm206, %v452
      %v460 = vld [vmem:[%s180 + $0x1] sm:$0x1]
      %v461 = vld [vmem:[%s180 + $0x5] sm:$0x1]
      %v462 = vld [vmem:[%s180 + $0x9] sm:$0x1]
      %v463 = vld [vmem:[%s180 + $0xd] sm:$0x1]
      %v464 = vmul.f32 %v460, 0.2857143
      %v465 = vmul.f32 %v461, 0.2857143
      %v466 = vmul.f32 %v462, 0.2857143
      %v467 = vmul.f32 %v463, 0.2857143
      %v468 = vld [vmem:[%s180 + $0x2] sm:$0x1]
      %v469 = vld [vmem:[%s180 + $0x6] sm:$0x1]
      %v470 = vld [vmem:[%s180 + $0xa] sm:$0x1]
      %v471 = vld [vmem:[%s180 + $0xe] sm:$0x1]
      %v472 = vmul.f32 %v468, 0.71428573
      %v473 = vmul.f32 %v469, 0.71428573
      %v474 = vmul.f32 %v470, 0.71428573
      %v475 = vmul.f32 %v471, 0.71428573
      %v476 = vadd.f32 %v464, %v472
      %v477 = vadd.f32 %v465, %v473
      %v478 = vadd.f32 %v466, %v474
      %v479 = vadd.f32 %v467, %v475
      %v484 = vrot.slane %v477, 7
      %v485 = vsel %vm229, %v484, %v476
      %v486 = vrot.slane %v478, 6
      %v487 = vsel %vm232, %v486, %v485
      %v488 = vrot.slane %v479, 5
      %v489 = vsel %vm235, %v488, %v487
      %v490 = vsel %vm237, %v489, 0
      %492 = vmatpush.msra.mxu0 0.0
      %493 = vmatpush.msra.mxu0 0.0
      %494 = vmatpush.msra.mxu0 0.0
      %495 = vmatpush.msra.mxu0 0.0
      %496 = vmatpush.msra.mxu0 0.0
      %497 = vmatpush.msra.mxu0 0.0
      %498 = vmatpush.msra.mxu0 0.0
      %499 = vmatpush.msra.mxu0 0.0
      %500 = vmatpush.msra.mxu0 0.0
      %501 = vmatpush.msra.mxu0 0.0
      %502 = vmatpush.msra.mxu0 0.0
      %503 = vmatpush.msra.mxu0 0.0
      %504 = vmatpush.msra.mxu0 0.0
      %505 = vmatpush.msra.mxu0 0.0
      %506 = vmatpush.msra.mxu0 %v219
      %507 = vmatpush.msra.mxu0 %v218
      %508 = vmatmul.f32.gmra.mxu0 %v490
      %v509 = vpop.f32.mrf.mxu0
      %v510 = vadd.f32 0.0, %v509
      %511 = vdwg.mxu0
      %v513 = vrot.slane %v510, 1
      %v514 = vrot.slane %v510, 2
      %v515 = vrot.slane %v510, 3
      %519 = vst.msk [vmem:[%s190 + $0x4] sm:$0x1] %vm206, %v510
      %520 = vst.msk [vmem:[%s190 + $0x14] sm:$0x1] %vm206, %v513
      %521 = vst.msk [vmem:[%s190 + $0x24] sm:$0x1] %vm206, %v514
      %522 = vst.msk [vmem:[%s190 + $0x34] sm:$0x1] %vm206, %v515
      %v523 = vld [vmem:[%s180 + $0x2] sm:$0x1]
      %v524 = vld [vmem:[%s180 + $0x6] sm:$0x1]
      %v525 = vld [vmem:[%s180 + $0xa] sm:$0x1]
      %v526 = vld [vmem:[%s180 + $0xe] sm:$0x1]
      %v527 = vmul.f32 %v523, 0.85714287
      %v528 = vmul.f32 %v524, 0.85714287
      %v529 = vmul.f32 %v525, 0.85714287
      %v530 = vmul.f32 %v526, 0.85714287
      %v531 = vld [vmem:[%s180 + $0x3] sm:$0x1]
      %v532 = vld [vmem:[%s180 + $0x7] sm:$0x1]
      %v533 = vld [vmem:[%s180 + $0xb] sm:$0x1]
      %v534 = vld [vmem:[%s180 + $0xf] sm:$0x1]
      %v535 = vmul.f32 %v531, 0.14285715
      %v536 = vmul.f32 %v532, 0.14285715
      %v537 = vmul.f32 %v533, 0.14285715
      %v538 = vmul.f32 %v534, 0.14285715
      %v539 = vadd.f32 %v527, %v535
      %v540 = vadd.f32 %v528, %v536
      %v541 = vadd.f32 %v529, %v537
      %v542 = vadd.f32 %v530, %v538
      %v547 = vrot.slane %v540, 7
      %v548 = vsel %vm229, %v547, %v539
      %v549 = vrot.slane %v541, 6
      %v550 = vsel %vm232, %v549, %v548
      %v551 = vrot.slane %v542, 5
      %v552 = vsel %vm235, %v551, %v550
      %v553 = vsel %vm237, %v552, 0
      %555 = vmatpush.msra.mxu0 0.0
      %556 = vmatpush.msra.mxu0 0.0
      %557 = vmatpush.msra.mxu0 0.0
      %558 = vmatpush.msra.mxu0 0.0
      %559 = vmatpush.msra.mxu0 0.0
      %560 = vmatpush.msra.mxu0 0.0
      %561 = vmatpush.msra.mxu0 0.0
      %562 = vmatpush.msra.mxu0 0.0
      %563 = vmatpush.msra.mxu0 0.0
      %564 = vmatpush.msra.mxu0 0.0
      %565 = vmatpush.msra.mxu0 0.0
      %566 = vmatpush.msra.mxu0 0.0
      %567 = vmatpush.msra.mxu0 0.0
      %568 = vmatpush.msra.mxu0 0.0
      %569 = vmatpush.msra.mxu0 %v219
      %570 = vmatpush.msra.mxu0 %v218
      %571 = vmatmul.f32.gmra.mxu0 %v553
      %v572 = vpop.f32.mrf.mxu0
      %v573 = vadd.f32 0.0, %v572
      %574 = vdwg.mxu0
      %v576 = vrot.slane %v573, 1
      %v577 = vrot.slane %v573, 2
      %v578 = vrot.slane %v573, 3
      %582 = vst.msk [vmem:[%s190 + $0x5] sm:$0x1] %vm206, %v573
      %583 = vst.msk [vmem:[%s190 + $0x15] sm:$0x1] %vm206, %v576
      %584 = vst.msk [vmem:[%s190 + $0x25] sm:$0x1] %vm206, %v577
      %585 = vst.msk [vmem:[%s190 + $0x35] sm:$0x1] %vm206, %v578
      %v586 = vld [vmem:[%s180 + $0x2] sm:$0x1]
      %v587 = vld [vmem:[%s180 + $0x6] sm:$0x1]
      %v588 = vld [vmem:[%s180 + $0xa] sm:$0x1]
      %v589 = vld [vmem:[%s180 + $0xe] sm:$0x1]
      %v590 = vmul.f32 %v586, 0.42857143
      %v591 = vmul.f32 %v587, 0.42857143
      %v592 = vmul.f32 %v588, 0.42857143
      %v593 = vmul.f32 %v589, 0.42857143
      %v594 = vld [vmem:[%s180 + $0x3] sm:$0x1]
      %v595 = vld [vmem:[%s180 + $0x7] sm:$0x1]
      %v596 = vld [vmem:[%s180 + $0xb] sm:$0x1]
      %v597 = vld [vmem:[%s180 + $0xf] sm:$0x1]
      %v598 = vmul.f32 %v594, 0.5714286
      %v599 = vmul.f32 %v595, 0.5714286
      %v600 = vmul.f32 %v596, 0.5714286
      %v601 = vmul.f32 %v597, 0.5714286
      %v602 = vadd.f32 %v590, %v598
      %v603 = vadd.f32 %v591, %v599
      %v604 = vadd.f32 %v592, %v600
      %v605 = vadd.f32 %v593, %v601
      %v610 = vrot.slane %v603, 7
      %v611 = vsel %vm229, %v610, %v602
      %v612 = vrot.slane %v604, 6
      %v613 = vsel %vm232, %v612, %v611
      %v614 = vrot.slane %v605, 5
      %v615 = vsel %vm235, %v614, %v613
      %v616 = vsel %vm237, %v615, 0
      %618 = vmatpush.msra.mxu0 0.0
      %619 = vmatpush.msra.mxu0 0.0
      %620 = vmatpush.msra.mxu0 0.0
      %621 = vmatpush.msra.mxu0 0.0
      %622 = vmatpush.msra.mxu0 0.0
      %623 = vmatpush.msra.mxu0 0.0
      %624 = vmatpush.msra.mxu0 0.0
      %625 = vmatpush.msra.mxu0 0.0
      %626 = vmatpush.msra.mxu0 0.0
      %627 = vmatpush.msra.mxu0 0.0
      %628 = vmatpush.msra.mxu0 0.0
      %629 = vmatpush.msra.mxu0 0.0
      %630 = vmatpush.msra.mxu0 0.0
      %631 = vmatpush.msra.mxu0 0.0
      %632 = vmatpush.msra.mxu0 %v219
      %633 = vmatpush.msra.mxu0 %v218
      %634 = vmatmul.f32.gmra.mxu0 %v616
      %v635 = vpop.f32.mrf.mxu0
      %v636 = vadd.f32 0.0, %v635
      %637 = vdwg.mxu0
      %v639 = vrot.slane %v636, 1
      %v640 = vrot.slane %v636, 2
      %v641 = vrot.slane %v636, 3
      %645 = vst.msk [vmem:[%s190 + $0x6] sm:$0x1] %vm206, %v636
      %646 = vst.msk [vmem:[%s190 + $0x16] sm:$0x1] %vm206, %v639
      %647 = vst.msk [vmem:[%s190 + $0x26] sm:$0x1] %vm206, %v640
      %648 = vst.msk [vmem:[%s190 + $0x36] sm:$0x1] %vm206, %v641
      %v649 = vld [vmem:[%s180 + $0x3] sm:$0x1]
      %v650 = vld [vmem:[%s180 + $0x7] sm:$0x1]
      %v651 = vld [vmem:[%s180 + $0xb] sm:$0x1]
      %v652 = vld [vmem:[%s180 + $0xf] sm:$0x1]
      %v657 = vrot.slane %v650, 7
      %v658 = vsel %vm229, %v657, %v649
      %v659 = vrot.slane %v651, 6
      %v660 = vsel %vm232, %v659, %v658
      %v661 = vrot.slane %v652, 5
      %v662 = vsel %vm235, %v661, %v660
      %v663 = vsel %vm237, %v662, 0
      %665 = vmatpush.msra.mxu0 0.0
      %666 = vmatpush.msra.mxu0 0.0
      %667 = vmatpush.msra.mxu0 0.0
      %668 = vmatpush.msra.mxu0 0.0
      %669 = vmatpush.msra.mxu0 0.0
      %670 = vmatpush.msra.mxu0 0.0
      %671 = vmatpush.msra.mxu0 0.0
      %672 = vmatpush.msra.mxu0 0.0
      %673 = vmatpush.msra.mxu0 0.0
      %674 = vmatpush.msra.mxu0 0.0
      %675 = vmatpush.msra.mxu0 0.0
      %676 = vmatpush.msra.mxu0 0.0
      %677 = vmatpush.msra.mxu0 0.0
      %678 = vmatpush.msra.mxu0 0.0
      %679 = vmatpush.msra.mxu0 %v219
      %680 = vmatpush.msra.mxu0 %v218
      %681 = vmatmul.f32.gmra.mxu0 %v663
      %v682 = vpop.f32.mrf.mxu0
      %v683 = vadd.f32 0.0, %v682
      %684 = vdwg.mxu0
      %v686 = vrot.slane %v683, 1
      %v687 = vrot.slane %v683, 2
      %v688 = vrot.slane %v683, 3
      %692 = vst.msk [vmem:[%s190 + $0x7] sm:$0x1] %vm206, %v683
      %693 = vst.msk [vmem:[%s190 + $0x17] sm:$0x1] %vm206, %v686
      %694 = vst.msk [vmem:[%s190 + $0x27] sm:$0x1] %vm206, %v687
      %695 = vst.msk [vmem:[%s190 + $0x37] sm:$0x1] %vm206, %v688
      %696 = vst.msk [vmem:[%s190 + $0x8] sm:$0x1] %vm206, 0.0
      %697 = vst.msk [vmem:[%s190 + $0x18] sm:$0x1] %vm206, 0.0
      %698 = vst.msk [vmem:[%s190 + $0x28] sm:$0x1] %vm206, 0.0
      %699 = vst.msk [vmem:[%s190 + $0x38] sm:$0x1] %vm206, 0.0
      %p700 = scmp.lt.s32.totalorder %s14, 1
      %s701 = scalar_select %p700, %s14, 1
      %s702 = smul.addr %s701, 20
      %s703 = smul.addr %s702, 8
      %s704 = scalar_lea.vmem %s3, %s703
      // Predicated region
      $region33: #{up_concat.1} parent=31 // pred_check
        %p705 = pneg %p105
      $region34: #{up_concat.1} parent=31 // pred_check_branch
        %707 = sbr.rel (%p705) target = $region36
      $region35: #{up_concat.1} parent=31 // pred_region
        _
      $region36: #{up_concat.1} parent=31 // pred_fallthru
        _
    $region32: #{up_concat.1} parent=5 // pred_fallthru
      _
    %p708 = scmp.le.s32.totalorder 2, %s9
    // Predicated region
    $region37: #{up_concat.1} parent=5 // pred_check
      %p709 = pneg %p708
    $region38: #{up_concat.1} parent=5 // pred_check_branch
      %711 = sbr.rel (%p709) target = $region40
    $region39: #{up_concat.1} parent=5 // pred_region
      %s712 = ssub.s32 %s9, 2
      // Predicated region
      $region41: #{up_concat.1} parent=39 // pred_check
        %p713 = pneg %p111
      $region42: #{up_concat.1} parent=39 // pred_check_branch
        %715 = sbr.rel (%p713) target = $region44
      $region43: #{up_concat.1} parent=39 // pred_region
        %p716 = scmp.lt.s32.totalorder %s15, 1
        %s717 = scalar_select %p716, %s15, 1
        %s718 = smul.addr %s717, 20
        %s719 = smul.addr %s718, 8
        %s720 = scalar_lea.vmem %s3, %s719
      $region44: #{up_concat.1} parent=39 // pred_fallthru
        _
    $region40: #{up_concat.1} parent=5 // pred_fallthru
      _
  $region6: #{up_concat.1} parent=0 // loop_footer
    %s13 = sadd.s32 1, %s9
  $region7: #{up_concat.1} parent=0 // loop_footer_branch
    %8 = sbr.rel target = $region3
  $region8: #{up_concat.1} parent=0 // loop_exit
    _

</llo_original>
